<compile_context>
chip_gen: v5e
topology: v5e:2x2
jax: 0.10.0
libtpu: 0.0.40
codegen_flags: <defaults>
</compile_context>

<pallas_src>
import functools

import jax
import jax.numpy as jnp
import numpy as np
from jax.experimental import pallas as pl
from jax.experimental.pallas import tpu as pltpu

_COLS = 1024            # lane-dense slab width (large multiple of 128)
_MAX_BLOCK_ROWS = 512   # (512, 1024) f32 = 2 MiB block

_GOLDEN = 0x9E3779B9    # Weyl increment
_M1 = 0x21F0AAAD        # lowbias32 mixer constants
_M2 = 0xD35A2D97


def _keep_mask(idx_u32, seed_u32, thr_u32):
    """Stateless keep decision: hash(global_index, seed) >= thr  (P = 1 - p)."""
    h = idx_u32 * jnp.uint32(_GOLDEN) + seed_u32
    h = h ^ (h >> 16)
    h = h * jnp.uint32(_M1)
    h = h ^ (h >> 15)
    h = h * jnp.uint32(_M2)
    h = h ^ (h >> 15)
    return h >= thr_u32


def _dropout_kernel(thr, scale, n_cols, block_rows, seed_ref, x_ref, o_ref):
    """Inverted dropout on one (block_rows, n_cols) lane-dense tile."""
    br, bc = x_ref.shape
    row = jax.lax.broadcasted_iota(jnp.int32, (br, bc), 0)
    col = jax.lax.broadcasted_iota(jnp.int32, (br, bc), 1)
    idx = ((pl.program_id(0) * block_rows + row) * n_cols + col).astype(jnp.uint32)
    keep = _keep_mask(idx, seed_ref[0].astype(jnp.uint32), jnp.uint32(thr))
    o_ref[...] = jnp.where(
        keep,
        x_ref[...].astype(jnp.float32) * jnp.float32(scale),
        jnp.float32(0.0),
    ).astype(o_ref.dtype)


def _dropout_tiny(values, thr, scale, seed):
    """Plain-JAX path (same hash math) for tails / tiny inputs (e.g. sparse nnz)."""
    n = values.shape[0]
    idx = jnp.arange(n, dtype=jnp.uint32)
    keep = _keep_mask(idx, jnp.uint32(seed & 0xFFFFFFFF), jnp.uint32(thr))
    return jnp.where(keep, values.astype(jnp.float32) * scale, 0.0).astype(values.dtype)


def _dropout_flat(values, p, seed, training):
    """Apply inverted dropout to a flat 1-D array."""
    if (not training) or p == 0.0:
        return values
    if p >= 1.0:                       # F.dropout(p=1) -> all zeros (avoid inf scale)
        return jnp.zeros_like(values)

    n = values.shape[0]
    thr = min(int(round(p * (1 << 32))), (1 << 32) - 1)
    scale = 1.0 / (1.0 - p)

    rows = n // _COLS
    if rows == 0:                      # tiny input: skip the Pallas launch entirely
        return _dropout_tiny(values, thr, scale, seed)

    n_main = rows * _COLS
    tail = n - n_main
    main = (values if tail == 0 else values[:n_main]).reshape(rows, _COLS)

    block_rows = min(_MAX_BLOCK_ROWS, rows)
    grid = pl.cdiv(rows, block_rows)   # ragged edge block is masked by Pallas

    out_main = pl.pallas_call(
        functools.partial(_dropout_kernel, thr, scale, _COLS, block_rows),
        out_shape=jax.ShapeDtypeStruct((rows, _COLS), values.dtype),
        grid_spec=pltpu.PrefetchScalarGridSpec(
            num_scalar_prefetch=1,
            grid=(grid,),
            in_specs=[pl.BlockSpec((block_rows, _COLS), lambda i, seed: (i, 0))],
            out_specs=pl.BlockSpec((block_rows, _COLS), lambda i, seed: (i, 0)),
        ),
        compiler_params=pltpu.CompilerParams(
            # counter-based hash -> grid steps are independent; lets v7x use both TCs
            dimension_semantics=("parallel",),
        ),
    )(jnp.asarray([seed], dtype=jnp.int32), main).reshape(-1)

    if tail == 0:
        return out_main

    idx_tail = jnp.arange(n_main, n, dtype=jnp.uint32)
    keep_t = _keep_mask(idx_tail, jnp.uint32(seed & 0xFFFFFFFF), jnp.uint32(thr))
    out_tail = jnp.where(
        keep_t, values[n_main:].astype(jnp.float32) * scale, 0.0
    ).astype(values.dtype)
    return jnp.concatenate([out_main, out_tail])


class MixedDropout:
    """JAX/Pallas port of MixedDropout.

    Dense inputs: jnp.ndarray of any shape (dropout is layout-agnostic).
    Sparse inputs: a (indices, values, shape) tuple mimicking a COO tensor
    (indices: [ndim, nnz] int32, values: [nnz]); dropout is applied to the
    values only, exactly like SparseDropout.
    """
    # TODO(synk): torch's .coalesce() (duplicate-index summation) is index bookkeeping
    # with no elementwise-kernel equivalent; inputs are assumed already coalesced.

    def __init__(self, p):
        self.p = p
        self.training = True  # nn.Module default

    def __call__(self, x, seed=0):
        if isinstance(x, tuple) and len(x) == 3:  # "is_sparse" path
            indices, values, shape = x
            new_vals = _dropout_flat(values, self.p, seed, self.training)
            return (indices, new_vals, shape)
        orig_shape = x.shape
        out = _dropout_flat(x.reshape(-1), self.p, seed, self.training)
        return out.reshape(orig_shape)


if __name__ == "__main__":
    key = jax.random.PRNGKey(0)
    k_dense, k_sparse_vals = jax.random.split(key)

    p = 0.5
    mod = MixedDropout(p)

    # --- dense path (NCHW-shaped input) ---
    x = jax.random.normal(k_dense, (2, 4, 16, 16), dtype=jnp.float32)
    y = jax.block_until_ready(mod(x, seed=123))
    assert y.shape == x.shape and y.dtype == x.dtype

    y_np, x_np = np.asarray(y), np.asarray(x)
    kept = y_np != 0.0
    np.testing.assert_allclose(y_np[kept], x_np[kept] / (1.0 - p),
                               rtol=1e-5, atol=1e-5)
    frac_kept = kept.mean()
    assert 0.2 < frac_kept < 0.8, f"implausible keep fraction {frac_kept}"

    # --- sparse path (COO triple: indices, values, shape) ---
    nnz = 37
    dense_shape = (16, 32)
    idx_r = jax.random.randint(jax.random.PRNGKey(1), (nnz,), 0, dense_shape[0])
    idx_c = jax.random.randint(jax.random.PRNGKey(2), (nnz,), 0, dense_shape[1])
    indices = jnp.stack([idx_r, idx_c]).astype(jnp.int32)
    values = jax.random.normal(k_sparse_vals, (nnz,), dtype=jnp.float32)

    s_idx, s_vals, s_shape = mod((indices, values, dense_shape), seed=7)
    s_vals = jax.block_until_ready(s_vals)
    assert s_vals.shape == (nnz,) and s_shape == dense_shape
    sv_np, v_np = np.asarray(s_vals), np.asarray(values)
    kept_s = sv_np != 0.0
    np.testing.assert_allclose(sv_np[kept_s], v_np[kept_s] / (1.0 - p),
                               rtol=1e-5, atol=1e-5)

    # eval mode is identity
    mod.training = False
    y_eval = jax.block_until_ready(mod(x, seed=123))
    np.testing.assert_array_equal(np.asarray(y_eval), x_np)

    # larger dense tensor exercises the multi-block grid (grid > 1, ragged rows)
    xl = jax.random.normal(jax.random.PRNGKey(3), (600, 2048), dtype=jnp.float32)
    mod.training = True
    yl = jax.block_until_ready(mod(xl, seed=42))
    yl_np, xl_np = np.asarray(yl), np.asarray(xl)
    kl = yl_np != 0.0
    np.testing.assert_allclose(yl_np[kl], xl_np[kl] / (1.0 - p), rtol=1e-5, atol=1e-5)
    assert 0.45 < kl.mean() < 0.55

    print("KERNEL_OK")
</pallas_src>

<mosaic_0001>
module attributes {stable_mosaic.version = 11 : i64} {
  func.func @_dropout_kernel(%arg0: i32, %arg1: memref<1xi32, #tpu.memory_space<smem>>, %arg2: memref<2x1024xf32, #tpu.memory_space<vmem>>, %arg3: memref<2x1024xf32, #tpu.memory_space<vmem>>) attributes {dimension_semantics = [#tpu.dimension_semantics<parallel>], iteration_bounds = array<i64: 1>, scalar_prefetch = 1 : i64, scratch_operands = 0 : i64, tpu.core_type = #tpu.core_type<tc>, window_params = [{transform_indices = @transform_0, window_bounds = array<i64: 2, 1024>}, {transform_indices = @transform_1, window_bounds = array<i64: 2, 1024>}]} {
    %0 = tpu.iota {dimensions = array<i32: 0>} : vector<2x1024xi32>
    %1 = tpu.iota {dimensions = array<i32: 1>} : vector<2x1024xi32>
    %c2_i32 = arith.constant 2 : i32
    %2 = arith.muli %arg0, %c2_i32 : i32
    %3 = vector.broadcast %2 : i32 to vector<2x1024xi32>
    %4 = arith.addi %3, %0 : vector<2x1024xi32>
    %c1024_i32 = arith.constant 1024 : i32
    %5 = vector.broadcast %c1024_i32 : i32 to vector<2x1024xi32>
    %6 = arith.muli %4, %5 : vector<2x1024xi32>
    %7 = arith.addi %6, %1 : vector<2x1024xi32>
    %c0 = arith.constant 0 : index
    %8 = memref.load %arg1[%c0] : memref<1xi32, #tpu.memory_space<smem>>
    %c-1640531527_i32 = arith.constant -1640531527 : i32
    %9 = vector.broadcast %c-1640531527_i32 : i32 to vector<2x1024xi32>
    %10 = arith.muli %7, %9 : vector<2x1024xi32>
    %11 = vector.broadcast %8 : i32 to vector<2x1024xi32>
    %12 = arith.addi %10, %11 : vector<2x1024xi32>
    %c16_i32 = arith.constant 16 : i32
    %13 = vector.broadcast %c16_i32 : i32 to vector<2x1024xi32>
    %14 = arith.shrui %12, %13 : vector<2x1024xi32>
    %15 = arith.xori %12, %14 : vector<2x1024xi32>
    %c569420461_i32 = arith.constant 569420461 : i32
    %16 = vector.broadcast %c569420461_i32 : i32 to vector<2x1024xi32>
    %17 = arith.muli %15, %16 : vector<2x1024xi32>
    %c15_i32 = arith.constant 15 : i32
    %18 = vector.broadcast %c15_i32 : i32 to vector<2x1024xi32>
    %19 = arith.shrui %17, %18 : vector<2x1024xi32>
    %20 = arith.xori %17, %19 : vector<2x1024xi32>
    %c-749064809_i32 = arith.constant -749064809 : i32
    %21 = vector.broadcast %c-749064809_i32 : i32 to vector<2x1024xi32>
    %22 = arith.muli %20, %21 : vector<2x1024xi32>
    %c15_i32_0 = arith.constant 15 : i32
    %23 = vector.broadcast %c15_i32_0 : i32 to vector<2x1024xi32>
    %24 = arith.shrui %22, %23 : vector<2x1024xi32>
    %25 = arith.xori %22, %24 : vector<2x1024xi32>
    %c-2147483648_i32 = arith.constant -2147483648 : i32
    %26 = vector.broadcast %c-2147483648_i32 : i32 to vector<2x1024xi32>
    %27 = arith.cmpi uge, %25, %26 : vector<2x1024xi32>
    %c0_1 = arith.constant 0 : index
    %c0_2 = arith.constant 0 : index
    %28 = vector.load %arg2[%c0_1, %c0_2] : memref<2x1024xf32, #tpu.memory_space<vmem>>, vector<2x1024xf32>
    %cst = arith.constant 2.000000e+00 : f32
    %29 = vector.broadcast %cst : f32 to vector<2x1024xf32>
    %30 = arith.mulf %28, %29 : vector<2x1024xf32>
    %cst_3 = arith.constant 0.000000e+00 : f32
    %31 = vector.broadcast %cst_3 : f32 to vector<2x1024xf32>
    %32 = arith.select %27, %30, %31 : vector<2x1024xi1>, vector<2x1024xf32>
    %c0_4 = arith.constant 0 : index
    %c0_5 = arith.constant 0 : index
    %33 = vector.load %arg3[%c0_4, %c0_5] : memref<2x1024xf32, #tpu.memory_space<vmem>>, vector<2x1024xf32>
    tpu.vector_store %arg3[%c0_4, %c0_5], %32 {strides = array<i32>} : memref<2x1024xf32, #tpu.memory_space<vmem>>, vector<2x1024xf32>,
    return
  }
  func.func @transform_0(%arg0: i32, %arg1: memref<1xi32, #tpu.memory_space<smem>>) -> (i32, i32) {
    %c0_i32 = arith.constant 0 : i32
    %c0_i32_0 = arith.constant 0 : i32
    return %arg0, %c0_i32 : i32, i32
  }
  func.func @transform_1(%arg0: i32, %arg1: memref<1xi32, #tpu.memory_space<smem>>) -> (i32, i32) {
    %c0_i32 = arith.constant 0 : i32
    %c0_i32_0 = arith.constant 0 : i32
    return %arg0, %c0_i32 : i32, i32
  }
}

</mosaic_0001>

<llo_original>
// kernel: tpu_custom_call.1
$region0: #{tpu_custom_call.1}
  #allocation0 [shape = 'u32[]', space=smem, size = 0x4, offset = 0x4, fixed_abs, tag = 'smem constant byte address 0x4 - core index']
  #allocation1 [shape = 'u32[72,128]{1,0:T(1,128)}', space=vmem, size = 0x9000, scoped, tag = 'internal scratch']
  #allocation2 [shape = 's32[1]{0}', space=sflag, size = 0x4, scoped, tag = 'scoped memory for tpu_custom_call.1']
  #allocation3 [shape = 's32[1]{0:T(128)S(6)}', space=smem, size = 0x200, scoped, tag = 'prefetched SMEM operand 0']
  %s0 = inlined_call_operand.<no memory space> [shape: s32[1], index: 0, kind: input, shape index: {}]
  %s1 = inlined_call_operand.hbm [shape: f32[2,1024], index: 1, kind: input, shape index: {}]
  %s2 = inlined_call_operand.hbm [shape: f32[2,1024], index: 2, kind: output, shape index: {}]
  %s3 = sld [smem:[#allocation0]]
  $region18: #{tpu_custom_call.1} parent=0
    _
  %s5 = ssub.s32 1, %s3
  %s6 = scalar_select 0, %s5, %s3
  %7 = sst [smem:[#allocation3]] %s0
  $region1: #{tpu_custom_call.1} parent=0
    #allocation4 [shape = 'u8[8192]{0}', space=vmem, size = 0x2000, scoped, tag = 'input window, operand 1, single buffered']
    #allocation5 [shape = 's32[1]{0}', space=sflag, size = 0x4, scoped, tag = 'scoped memory for tpu_custom_call.1']
    #allocation6 [shape = 's32[1]{0}', space=sflag, size = 0x4, scoped, tag = 'scoped memory for tpu_custom_call.1']
    #allocation7 [shape = 'u8[8192]{0}', space=vmem, size = 0x2000, scoped, tag = 'output window, operand 0, single buffered']
    %8 = vsyncpa [#allocation5], 0
    %9 = vsyncpa [#allocation6], 0
    // Predicated region
    $region2: #{tpu_custom_call.1} parent=1 // pred_check
      _
    $region3: #{tpu_custom_call.1} parent=1 // pred_check_branch
      %11 = sbr.rel (0) target = $region5
    $region4: #{tpu_custom_call.1} parent=1 // pred_region
      %13 = vsyncadd [#allocation5], 0
      %s15 = sshll.u32 %s1, 4
      %s16 = int_to_ptr.hbm [resolvable:$true] %s15
      %s17 = sshll.u32 [#allocation4], 4
      %s18 = int_to_ptr.vmem [resolvable:$true] %s17
      %20 = dma.hbm_to_vmem [thread:$0]  %s16, 256, %s18, [#allocation5]
    $region5: #{tpu_custom_call.1} parent=1 // pred_fallthru
      _
    // Predicated region
    $region6: #{tpu_custom_call.1} parent=1 // pred_check
      _
    $region7: #{tpu_custom_call.1} parent=1 // pred_check_branch
      %22 = sbr.rel (0) target = $region9
    $region8: #{tpu_custom_call.1} parent=1 // pred_region
      %24 = dma.done [#allocation5], 256
    $region9: #{tpu_custom_call.1} parent=1 // pred_fallthru
      _
    %v25 = vlaneseq
    %v26 = vshrl.u32 %v25, 7
    %v27 = vlaneseq
    %v28 = vand.u32 %v27, 127
    %v29 = vadd.s32 %v28, 128
    %v30 = vadd.s32 %v28, 256
    %v31 = vadd.s32 %v28, 384
    %v32 = vadd.s32 %v28, 512
    %v33 = vadd.s32 %v28, 640
    %v34 = vadd.s32 %v28, 768
    %v35 = vadd.s32 %v28, 896
    %s36 = smul.u32 0, 2
    %v37 = vstv %s36
    %v38 = vadd.s32 %v37, %v26
    %v39 = vmul.u32 %v38, 1024
    %v40 = vadd.s32 %v39, %v28
    %v41 = vadd.s32 %v39, %v29
    %v42 = vadd.s32 %v39, %v30
    %v43 = vadd.s32 %v39, %v31
    %v44 = vadd.s32 %v39, %v32
    %v45 = vadd.s32 %v39, %v33
    %v46 = vadd.s32 %v39, %v34
    %v47 = vadd.s32 %v39, %v35
    %s48 = sld [smem:[#allocation3]]
    %v49 = vmul.u32 %v40, 2654435769
    %v50 = vmul.u32 %v41, 2654435769
    %v51 = vmul.u32 %v42, 2654435769
    %v52 = vmul.u32 %v43, 2654435769
    %v53 = vmul.u32 %v44, 2654435769
    %v54 = vmul.u32 %v45, 2654435769
    %v55 = vmul.u32 %v46, 2654435769
    %v56 = vmul.u32 %v47, 2654435769
    %v57 = vstv %s48
    %v58 = vadd.s32 %v49, %v57
    %v59 = vadd.s32 %v50, %v57
    %v60 = vadd.s32 %v51, %v57
    %v61 = vadd.s32 %v52, %v57
    %v62 = vadd.s32 %v53, %v57
    %v63 = vadd.s32 %v54, %v57
    %v64 = vadd.s32 %v55, %v57
    %v65 = vadd.s32 %v56, %v57
    %v66 = vshrl.u32 %v58, 16
    %v67 = vshrl.u32 %v59, 16
    %v68 = vshrl.u32 %v60, 16
    %v69 = vshrl.u32 %v61, 16
    %v70 = vshrl.u32 %v62, 16
    %v71 = vshrl.u32 %v63, 16
    %v72 = vshrl.u32 %v64, 16
    %v73 = vshrl.u32 %v65, 16
    %v74 = vxor.u32 %v58, %v66
    %v75 = vxor.u32 %v59, %v67
    %v76 = vxor.u32 %v60, %v68
    %v77 = vxor.u32 %v61, %v69
    %v78 = vxor.u32 %v62, %v70
    %v79 = vxor.u32 %v63, %v71
    %v80 = vxor.u32 %v64, %v72
    %v81 = vxor.u32 %v65, %v73
    %v82 = vmul.u32 %v74, 569420461
    %v83 = vmul.u32 %v75, 569420461
    %v84 = vmul.u32 %v76, 569420461
    %v85 = vmul.u32 %v77, 569420461
    %v86 = vmul.u32 %v78, 569420461
    %v87 = vmul.u32 %v79, 569420461
    %v88 = vmul.u32 %v80, 569420461
    %v89 = vmul.u32 %v81, 569420461
    %v90 = vshrl.u32 %v82, 15
    %v91 = vshrl.u32 %v83, 15
    %v92 = vshrl.u32 %v84, 15
    %v93 = vshrl.u32 %v85, 15
    %v94 = vshrl.u32 %v86, 15
    %v95 = vshrl.u32 %v87, 15
    %v96 = vshrl.u32 %v88, 15
    %v97 = vshrl.u32 %v89, 15
    %v98 = vxor.u32 %v82, %v90
    %v99 = vxor.u32 %v83, %v91
    %v100 = vxor.u32 %v84, %v92
    %v101 = vxor.u32 %v85, %v93
    %v102 = vxor.u32 %v86, %v94
    %v103 = vxor.u32 %v87, %v95
    %v104 = vxor.u32 %v88, %v96
    %v105 = vxor.u32 %v89, %v97
    %v106 = vmul.u32 %v98, 3545902487
    %v107 = vmul.u32 %v99, 3545902487
    %v108 = vmul.u32 %v100, 3545902487
    %v109 = vmul.u32 %v101, 3545902487
    %v110 = vmul.u32 %v102, 3545902487
    %v111 = vmul.u32 %v103, 3545902487
    %v112 = vmul.u32 %v104, 3545902487
    %v113 = vmul.u32 %v105, 3545902487
    %v114 = vshrl.u32 %v106, 15
    %v115 = vshrl.u32 %v107, 15
    %v116 = vshrl.u32 %v108, 15
    %v117 = vshrl.u32 %v109, 15
    %v118 = vshrl.u32 %v110, 15
    %v119 = vshrl.u32 %v111, 15
    %v120 = vshrl.u32 %v112, 15
    %v121 = vshrl.u32 %v113, 15
    %v122 = vxor.u32 %v106, %v114
    %v123 = vxor.u32 %v107, %v115
    %v124 = vxor.u32 %v108, %v116
    %v125 = vxor.u32 %v109, %v117
    %v126 = vxor.u32 %v110, %v118
    %v127 = vxor.u32 %v111, %v119
    %v128 = vxor.u32 %v112, %v120
    %v129 = vxor.u32 %v113, %v121
    %v130 = vadd.s32 %v122, 2147483648
    %vm132 = vcmp.ge.s32.totalorder %v130, 0
    %v133 = vadd.s32 %v123, 2147483648
    %vm135 = vcmp.ge.s32.totalorder %v133, 0
    %v136 = vadd.s32 %v124, 2147483648
    %vm138 = vcmp.ge.s32.totalorder %v136, 0
    %v139 = vadd.s32 %v125, 2147483648
    %vm141 = vcmp.ge.s32.totalorder %v139, 0
    %v142 = vadd.s32 %v126, 2147483648
    %vm144 = vcmp.ge.s32.totalorder %v142, 0
    %v145 = vadd.s32 %v127, 2147483648
    %vm147 = vcmp.ge.s32.totalorder %v145, 0
    %v148 = vadd.s32 %v128, 2147483648
    %vm150 = vcmp.ge.s32.totalorder %v148, 0
    %v151 = vadd.s32 %v129, 2147483648
    %vm153 = vcmp.ge.s32.totalorder %v151, 0
    %v154 = vld [vmem:[#allocation4] sm:$0xff]
    %v155 = vld [vmem:[#allocation4 + $0x8] sm:$0xff]
    %v156 = vmul.f32 %v154, 2.0
    %v157 = vmul.f32 %v155, 2.0
    %160 = vst [vmem:[#allocation1] ss:$4 sm:$0xff] %v156
    %s161 = scalar_lea.vmem [#allocation1], 32
    %162 = vst [vmem:[%s161] ss:$4 sm:$0xff] %v157
    %v163 = vld.sshfl [vmem:[#allocation1] sm:$0xff pattern:$0x73625140]
    %v164 = vld.sshfl [vmem:[#allocation1 + $0x8] sm:$0xff pattern:$0x73625140]
    %v165 = vld.sshfl [vmem:[#allocation1 + $0x10] sm:$0xff pattern:$0x73625140]
    %v166 = vld.sshfl [vmem:[#allocation1 + $0x18] sm:$0xff pattern:$0x73625140]
    %v167 = vld.sshfl [vmem:[#allocation1 + $0x20] sm:$0xff pattern:$0x73625140]
    %v168 = vld.sshfl [vmem:[#allocation1 + $0x28] sm:$0xff pattern:$0x73625140]
    %v169 = vld.sshfl [vmem:[#allocation1 + $0x30] sm:$0xff pattern:$0x73625140]
    %v170 = vld.sshfl [vmem:[#allocation1 + $0x38] sm:$0xff pattern:$0x73625140]
    %v179 = vsel %vm132, %v163, 0.0
    %v180 = vsel %vm135, %v164, 0.0
    %v181 = vsel %vm138, %v165, 0.0
    %v182 = vsel %vm141, %v166, 0.0
    %v183 = vsel %vm144, %v167, 0.0
    %v184 = vsel %vm147, %v168, 0.0
    %v185 = vsel %vm150, %v169, 0.0
    %v186 = vsel %vm153, %v170, 0.0
    %v195 = vrot.slane %v180, 6
    %v196 = vrot.slane %v181, 4
    %v197 = vrot.slane %v182, 2
    %v198 = vrot.slane %v184, 6
    %v199 = vrot.slane %v185, 4
    %v200 = vrot.slane %v186, 2
    %vm201 = vcmask 1041408
    %v202 = vsel %vm201, %v179, %v195
    %vm203 = vcmask 1045508
    %v204 = vsel %vm203, %v196, %v197
    %vm205 = vcmask 1043456
    %v206 = vsel %vm205, %v202, %v204
    %v207 = vsel %vm201, %v183, %v198
    %v208 = vsel %vm203, %v199, %v200
    %v209 = vsel %vm205, %v207, %v208
    %212 = vst [vmem:[#allocation7] sm:$0xff] %v206
    %213 = vst [vmem:[#allocation7 + $0x8] sm:$0xff] %v209
    // Predicated region
    $region10: #{tpu_custom_call.1} parent=1 // pred_check
      _
    $region11: #{tpu_custom_call.1} parent=1 // pred_check_branch
      %215 = sbr.rel (0) target = $region13
    $region12: #{tpu_custom_call.1} parent=1 // pred_region
      %217 = vsyncadd [#allocation6], 0
      %s219 = sshll.u32 [#allocation7], 4
      %s220 = int_to_ptr.vmem [resolvable:$true] %s219
      %s221 = sshll.u32 %s2, 4
      %s222 = int_to_ptr.hbm [resolvable:$true] %s221
      %224 = dma.vmem_to_hbm [thread:$0]  %s220, 256, %s222, [#allocation6]
    $region13: #{tpu_custom_call.1} parent=1 // pred_fallthru
      _
    // Predicated region
    $region14: #{tpu_custom_call.1} parent=1 // pred_check
      _
    $region15: #{tpu_custom_call.1} parent=1 // pred_check_branch
      %226 = sbr.rel (0) target = $region17
    $region16: #{tpu_custom_call.1} parent=1 // pred_region
      %228 = dma.done [#allocation6], 256
    $region17: #{tpu_custom_call.1} parent=1 // pred_fallthru
      _
    %229 = vsyncpa [#allocation5], 1
    %230 = vsyncpa [#allocation6], 1

</llo_original>
